<compile_context>
chip_gen: v7x
topology: tpu7x:2x2x1
jax: 0.10.0
libtpu: 0.0.40
codegen_flags: <defaults>
</compile_context>

<pallas_src>
import jax
import jax.numpy as jnp
from jax.experimental import pallas as pl
from jax.experimental.pallas import tpu as pltpu


def _round_up(n, m):
    return ((n + m - 1) // m) * m


def _make_mlp_kernel(num_layers, add_linear):
    """Kernel for `num_layers` Linear layers (ReLU between all but last), plus an
    optional bias-free linear term added to the output."""

    def kernel(*refs):
        # refs: x, (w_0, b_0), ..., (w_{L-1}, b_{L-1}), [w_lin], out
        x_ref = refs[0]
        out_ref = refs[-1]
        wb_refs = refs[1:1 + 2 * num_layers]
        lin_ref = refs[1 + 2 * num_layers] if add_linear else None

        # No forced .astype on the dot inputs: dtypes flow through, so narrowing
        # x / weights to bf16 later would hit the bf16 MXU path directly.
        x = x_ref[...]
        h = x
        for li in range(num_layers):
            w = wb_refs[2 * li][...]
            b = wb_refs[2 * li + 1][...]          # (1, out) row, broadcasts over tile
            h = jnp.dot(h, w, preferred_element_type=jnp.float32) + b
            if li < num_layers - 1:
                h = jnp.maximum(h, 0.0)           # ReLU on the VPU

        if add_linear:
            # Extra N=1 MXU push + VPU add; kernel is HBM-bound on x so this is
            # hidden under the DMA of the next x tile.
            h = h + jnp.dot(x, lin_ref[...], preferred_element_type=jnp.float32)

        out_ref[...] = h.astype(out_ref.dtype)

    return kernel


def mlp_forward(x, weights, biases, linear_w=None, *, tile_b=512):
    """Run the MLP forward pass in one Pallas call, tiled over the batch.

    x:        (B, F) float32
    weights:  list of (in, out) matrices (already transposed from PyTorch layout)
    biases:   list of (out,) vectors, same length as weights
    linear_w: optional (F, 1) matrix for the `add_linear` branch
    tile_b:   batch tile (multiple of 8). 512+ amortizes per-step overhead and
              fills MXU sublanes; tile_b*(F+out)*4B*2 buffers is far below the
              scoped-VMEM budget of every generation (incl. v7x's 64 MiB VMEM).
    """
    num_layers = len(weights)
    add_linear = linear_w is not None
    B, F = x.shape
    out_dim = weights[-1].shape[1]

    # Clamp tile to the (8-rounded) batch for small problems, then pad the batch
    # so the grid divides evenly; padded rows are sliced off at the end.
    tile_b = max(8, min(tile_b, _round_up(B, 8)))
    b_pad = _round_up(B, tile_b)
    x_p = x if b_pad == B else jnp.pad(x, ((0, b_pad - B), (0, 0)))

    args = [x_p]
    for w, b in zip(weights, biases):
        args.append(w)
        args.append(b.reshape(1, -1))
    if add_linear:
        args.append(linear_w)

    # x/out: batch-tiled, pipelined.  Weights/biases: full-shape blocks with a
    # constant index_map -> loaded once, resident in VMEM for the whole grid.
    in_specs = [pl.BlockSpec((tile_b, F), lambda i: (i, 0))]
    for a in args[1:]:
        in_specs.append(pl.BlockSpec(a.shape, lambda i: (0, 0)))
    out_specs = pl.BlockSpec((tile_b, out_dim), lambda i: (i, 0))

    # Advisory cost estimate for XLA's scheduler.
    flops = sum(2 * b_pad * w.shape[0] * w.shape[1] for w in weights)
    if add_linear:
        flops += 2 * b_pad * F * out_dim
    bytes_accessed = 4 * (x_p.size + b_pad * out_dim + sum(int(a.size) for a in args[1:]))

    kernel = _make_mlp_kernel(num_layers, add_linear)

    y = pl.pallas_call(
        kernel,
        out_shape=jax.ShapeDtypeStruct((b_pad, out_dim), jnp.float32),
        grid=(b_pad // tile_b,),
        in_specs=in_specs,
        out_specs=out_specs,
        compiler_params=pltpu.CompilerParams(
            dimension_semantics=("parallel",),   # shard batch tiles across TCs on v7x
        ),
        cost_estimate=pl.CostEstimate(
            flops=flops, transcendentals=0, bytes_accessed=bytes_accessed),
    )(*args)
    return y[:B] if b_pad != B else y


def init_params(key, num_features, hidden_units, add_linear):
    """Deterministic parameter init mimicking nn.Linear's uniform(-1/sqrt(fan_in), +)."""
    sizes = [num_features] + list(hidden_units) + [1]
    weights, biases = [], []
    for i in range(1, len(sizes)):
        fan_in, fan_out = sizes[i - 1], sizes[i]
        key, kw, kb = jax.random.split(key, 3)
        bound = 1.0 / jnp.sqrt(fan_in)
        # stored as (in, out) == PyTorch weight.T
        w = jax.random.uniform(kw, (fan_in, fan_out), jnp.float32, -bound, bound)
        b = jax.random.uniform(kb, (fan_out,), jnp.float32, -bound, bound)
        weights.append(w)
        biases.append(b)
    linear_w = None
    if add_linear:
        key, kl = jax.random.split(key)
        bound = 1.0 / jnp.sqrt(num_features)
        linear_w = jax.random.uniform(kl, (num_features, 1), jnp.float32, -bound, bound)
    return weights, biases, linear_w


def mlp_reference(x, weights, biases, linear_w=None):
    h = x
    for i, (w, b) in enumerate(zip(weights, biases)):
        h = h @ w + b
        if i < len(weights) - 1:
            h = jnp.maximum(h, 0.0)
    if linear_w is not None:
        h = h + x @ linear_w
    return h


if __name__ == "__main__":
    key = jax.random.PRNGKey(0)
    num_features = 32
    hidden_units = [32, 16]
    add_linear = True

    weights, biases, linear_w = init_params(key, num_features, hidden_units, add_linear)

    # (1) small sanity check (batch=8, single tile) and
    # (2) multi-tile, non-divisible batch (1040 rows, tile 256 -> grid of 5 with
    #     padding) to exercise the pipelined grid and the pad-and-slice path.
    for batch, tile_b in ((8, 512), (1040, 256)):
        key, kx = jax.random.split(key)
        x = jax.random.normal(kx, (batch, num_features), jnp.float32)

        y = jax.block_until_ready(mlp_forward(x, weights, biases, linear_w, tile_b=tile_b))
        y_ref = mlp_reference(x, weights, biases, linear_w)

        assert y.shape == (batch, 1), y.shape
        assert jnp.allclose(y, y_ref, atol=1e-5, rtol=1e-5)

    print("KERNEL_OK")
</pallas_src>

<mosaic_0001>
module attributes {stable_mosaic.version = 11 : i64} {
  func.func @kernel(%arg0: i32, %arg1: memref<8x32xf32, #tpu.memory_space<vmem>>, %arg2: memref<32x32xf32, #tpu.memory_space<vmem>>, %arg3: memref<1x32xf32, #tpu.memory_space<vmem>>, %arg4: memref<32x16xf32, #tpu.memory_space<vmem>>, %arg5: memref<1x16xf32, #tpu.memory_space<vmem>>, %arg6: memref<16x1xf32, #tpu.memory_space<vmem>>, %arg7: memref<1x1xf32, #tpu.memory_space<vmem>>, %arg8: memref<32x1xf32, #tpu.memory_space<vmem>>, %arg9: memref<8x1xf32, #tpu.memory_space<vmem>>) attributes {dimension_semantics = [#tpu.dimension_semantics<parallel>], iteration_bounds = array<i64: 1>, scalar_prefetch = 0 : i64, scratch_operands = 0 : i64, tpu.core_type = #tpu.core_type<tc>, window_params = [{transform_indices = @transform_0, window_bounds = array<i64: 8, 32>}, {pipeline_mode = #tpu.pipeline_mode<synchronous>, transform_indices = @transform_1, window_bounds = array<i64: 32, 32>}, {pipeline_mode = #tpu.pipeline_mode<synchronous>, transform_indices = @transform_2, window_bounds = array<i64: 1, 32>}, {pipeline_mode = #tpu.pipeline_mode<synchronous>, transform_indices = @transform_3, window_bounds = array<i64: 32, 16>}, {pipeline_mode = #tpu.pipeline_mode<synchronous>, transform_indices = @transform_4, window_bounds = array<i64: 1, 16>}, {pipeline_mode = #tpu.pipeline_mode<synchronous>, transform_indices = @transform_5, window_bounds = array<i64: 16, 1>}, {pipeline_mode = #tpu.pipeline_mode<synchronous>, transform_indices = @transform_6, window_bounds = array<i64: 1, 1>}, {pipeline_mode = #tpu.pipeline_mode<synchronous>, transform_indices = @transform_7, window_bounds = array<i64: 32, 1>}, {transform_indices = @transform_8, window_bounds = array<i64: 8, 1>}]} {
    %c0 = arith.constant 0 : index
    %c0_0 = arith.constant 0 : index
    %0 = vector.load %arg1[%c0, %c0_0] : memref<8x32xf32, #tpu.memory_space<vmem>>, vector<8x32xf32>
    %c0_1 = arith.constant 0 : index
    %c0_2 = arith.constant 0 : index
    %1 = vector.load %arg2[%c0_1, %c0_2] : memref<32x32xf32, #tpu.memory_space<vmem>>, vector<32x32xf32>
    %c0_3 = arith.constant 0 : index
    %c0_4 = arith.constant 0 : index
    %2 = vector.load %arg3[%c0_3, %c0_4] : memref<1x32xf32, #tpu.memory_space<vmem>>, vector<1x32xf32>
    %cst = arith.constant dense<0.000000e+00> : vector<8x32xf32>
    %3 = tpu.matmul %0, %1, %cst {dimension_numbers = #tpu.dot_dimension_numbers<[1], [0], [0], [1], [0, 0, 1, 1], [], []>} : vector<8x32xf32>, vector<32x32xf32>, vector<8x32xf32> -> vector<8x32xf32>
    %4 = vector.broadcast %2 : vector<1x32xf32> to vector<8x32xf32>
    %5 = arith.addf %3, %4 : vector<8x32xf32>
    %cst_5 = arith.constant 0.000000e+00 : f32
    %6 = vector.broadcast %cst_5 : f32 to vector<8x32xf32>
    %7 = arith.maximumf %5, %6 : vector<8x32xf32>
    %c0_6 = arith.constant 0 : index
    %c0_7 = arith.constant 0 : index
    %8 = vector.load %arg4[%c0_6, %c0_7] : memref<32x16xf32, #tpu.memory_space<vmem>>, vector<32x16xf32>
    %c0_8 = arith.constant 0 : index
    %c0_9 = arith.constant 0 : index
    %9 = vector.load %arg5[%c0_8, %c0_9] : memref<1x16xf32, #tpu.memory_space<vmem>>, vector<1x16xf32>
    %cst_10 = arith.constant dense<0.000000e+00> : vector<8x16xf32>
    %10 = tpu.matmul %7, %8, %cst_10 {dimension_numbers = #tpu.dot_dimension_numbers<[1], [0], [0], [1], [0, 0, 1, 1], [], []>} : vector<8x32xf32>, vector<32x16xf32>, vector<8x16xf32> -> vector<8x16xf32>
    %11 = vector.broadcast %9 : vector<1x16xf32> to vector<8x16xf32>
    %12 = arith.addf %10, %11 : vector<8x16xf32>
    %cst_11 = arith.constant 0.000000e+00 : f32
    %13 = vector.broadcast %cst_11 : f32 to vector<8x16xf32>
    %14 = arith.maximumf %12, %13 : vector<8x16xf32>
    %c0_12 = arith.constant 0 : index
    %c0_13 = arith.constant 0 : index
    %15 = vector.load %arg6[%c0_12, %c0_13] : memref<16x1xf32, #tpu.memory_space<vmem>>, vector<16x1xf32>
    %c0_14 = arith.constant 0 : index
    %c0_15 = arith.constant 0 : index
    %16 = vector.load %arg7[%c0_14, %c0_15] : memref<1x1xf32, #tpu.memory_space<vmem>>, vector<1x1xf32>
    %cst_16 = arith.constant dense<0.000000e+00> : vector<8x1xf32>
    %17 = tpu.matmul %14, %15, %cst_16 {dimension_numbers = #tpu.dot_dimension_numbers<[1], [0], [0], [1], [0, 0, 1, 1], [], []>} : vector<8x16xf32>, vector<16x1xf32>, vector<8x1xf32> -> vector<8x1xf32>
    %18 = vector.broadcast %16 : vector<1x1xf32> to vector<8x1xf32>
    %19 = arith.addf %17, %18 : vector<8x1xf32>
    %c0_17 = arith.constant 0 : index
    %c0_18 = arith.constant 0 : index
    %20 = vector.load %arg8[%c0_17, %c0_18] : memref<32x1xf32, #tpu.memory_space<vmem>>, vector<32x1xf32>
    %cst_19 = arith.constant dense<0.000000e+00> : vector<8x1xf32>
    %21 = tpu.matmul %0, %20, %cst_19 {dimension_numbers = #tpu.dot_dimension_numbers<[1], [0], [0], [1], [0, 0, 1, 1], [], []>} : vector<8x32xf32>, vector<32x1xf32>, vector<8x1xf32> -> vector<8x1xf32>
    %22 = arith.addf %19, %21 : vector<8x1xf32>
    %c0_20 = arith.constant 0 : index
    %c0_21 = arith.constant 0 : index
    %23 = vector.load %arg9[%c0_20, %c0_21] : memref<8x1xf32, #tpu.memory_space<vmem>>, vector<8x1xf32>
    tpu.vector_store %arg9[%c0_20, %c0_21], %22 {strides = array<i32>} : memref<8x1xf32, #tpu.memory_space<vmem>>, vector<8x1xf32>,
    return
  }
  func.func @transform_0(%arg0: i32) -> (i32, i32) {
    %c0_i32 = arith.constant 0 : i32
    %c0_i32_0 = arith.constant 0 : i32
    return %arg0, %c0_i32 : i32, i32
  }
  func.func @transform_1(%arg0: i32) -> (i32, i32) {
    %c0_i32 = arith.constant 0 : i32
    %c0_i32_0 = arith.constant 0 : i32
    %c0_i32_1 = arith.constant 0 : i32
    return %c0_i32, %c0_i32_0 : i32, i32
  }
  func.func @transform_2(%arg0: i32) -> (i32, i32) {
    %c0_i32 = arith.constant 0 : i32
    %c0_i32_0 = arith.constant 0 : i32
    %c0_i32_1 = arith.constant 0 : i32
    return %c0_i32, %c0_i32_0 : i32, i32
  }
  func.func @transform_3(%arg0: i32) -> (i32, i32) {
    %c0_i32 = arith.constant 0 : i32
    %c0_i32_0 = arith.constant 0 : i32
    %c0_i32_1 = arith.constant 0 : i32
    return %c0_i32, %c0_i32_0 : i32, i32
  }
  func.func @transform_4(%arg0: i32) -> (i32, i32) {
    %c0_i32 = arith.constant 0 : i32
    %c0_i32_0 = arith.constant 0 : i32
    %c0_i32_1 = arith.constant 0 : i32
    return %c0_i32, %c0_i32_0 : i32, i32
  }
  func.func @transform_5(%arg0: i32) -> (i32, i32) {
    %c0_i32 = arith.constant 0 : i32
    %c0_i32_0 = arith.constant 0 : i32
    %c0_i32_1 = arith.constant 0 : i32
    return %c0_i32, %c0_i32_0 : i32, i32
  }
  func.func @transform_6(%arg0: i32) -> (i32, i32) {
    %c0_i32 = arith.constant 0 : i32
    %c0_i32_0 = arith.constant 0 : i32
    %c0_i32_1 = arith.constant 0 : i32
    return %c0_i32, %c0_i32_0 : i32, i32
  }
  func.func @transform_7(%arg0: i32) -> (i32, i32) {
    %c0_i32 = arith.constant 0 : i32
    %c0_i32_0 = arith.constant 0 : i32
    %c0_i32_1 = arith.constant 0 : i32
    return %c0_i32, %c0_i32_0 : i32, i32
  }
  func.func @transform_8(%arg0: i32) -> (i32, i32) {
    %c0_i32 = arith.constant 0 : i32
    %c0_i32_0 = arith.constant 0 : i32
    return %arg0, %c0_i32 : i32, i32
  }
}

</mosaic_0001>

<llo_original>
// kernel: tpu_custom_call.1
$region0: #{tpu_custom_call.1}
  #allocation0 [shape = 'u32[]', space=smem, size = 0x4, offset = 0x4, fixed_abs, tag = 'smem constant byte address 0x4 - core index']
  #allocation1 [shape = 'u32[144,128]{1,0:T(1,128)}', space=vmem, size = 0x12000, scoped, tag = 'internal scratch']
  #allocation2 [shape = 'f32[1,1]{1,0:T(1,128)S(1)}', space=vmem, size = 0x200, scoped, tag = 'scoped memory for tpu_custom_call.1']
  %s0 = inlined_call_operand.vmem [shape: f32[8,32], index: 0, kind: input, shape index: {}]
  %s1 = inlined_call_operand.vmem [shape: f32[32,32], index: 1, kind: input, shape index: {}]
  %s2 = inlined_call_operand.vmem [shape: f32[1,32], index: 2, kind: input, shape index: {}]
  %s3 = inlined_call_operand.vmem [shape: f32[32,16], index: 3, kind: input, shape index: {}]
  %s4 = inlined_call_operand.vmem [shape: f32[1,16], index: 4, kind: input, shape index: {}]
  %s5 = inlined_call_operand.vmem [shape: f32[16,1], index: 5, kind: input, shape index: {}]
  %s6 = inlined_call_operand.<no memory space> [shape: f32[1,1], index: 6, kind: input, shape index: {}]
  %s7 = inlined_call_operand.vmem [shape: f32[32,1], index: 7, kind: input, shape index: {}]
  %s8 = inlined_call_operand.vmem [shape: f32[8,1], index: 8, kind: output, shape index: {}]
  %s9 = sld [smem:[#allocation0]]
  $region42: #{tpu_custom_call.1} parent=0
    _
  %s11 = ssub.s32 1, %s9
  %s12 = scalar_select 0, %s11, %s9
  %v13 = vstv %s6
  %14 = vst [vmem:[#allocation2] sm:$0x1] %v13
  // Predicated region
  $region2: #{tpu_custom_call.1} parent=0 // pred_check
    _
  $region3: #{tpu_custom_call.1} parent=0 // pred_check_branch
    %16 = sbr.rel (0) target = $region5
  $region4: #{tpu_custom_call.1} parent=0 // pred_region
    _
  $region5: #{tpu_custom_call.1} parent=0 // pred_fallthru
    _
  // Predicated region
  $region6: #{tpu_custom_call.1} parent=0 // pred_check
    _
  $region7: #{tpu_custom_call.1} parent=0 // pred_check_branch
    %18 = sbr.rel (0) target = $region9
  $region8: #{tpu_custom_call.1} parent=0 // pred_region
    _
  $region9: #{tpu_custom_call.1} parent=0 // pred_fallthru
    _
  // Predicated region
  $region10: #{tpu_custom_call.1} parent=0 // pred_check
    _
  $region11: #{tpu_custom_call.1} parent=0 // pred_check_branch
    %20 = sbr.rel (0) target = $region13
  $region12: #{tpu_custom_call.1} parent=0 // pred_region
    _
  $region13: #{tpu_custom_call.1} parent=0 // pred_fallthru
    _
  // Predicated region
  $region14: #{tpu_custom_call.1} parent=0 // pred_check
    _
  $region15: #{tpu_custom_call.1} parent=0 // pred_check_branch
    %22 = sbr.rel (0) target = $region17
  $region16: #{tpu_custom_call.1} parent=0 // pred_region
    _
  $region17: #{tpu_custom_call.1} parent=0 // pred_fallthru
    _
  // Predicated region
  $region18: #{tpu_custom_call.1} parent=0 // pred_check
    _
  $region19: #{tpu_custom_call.1} parent=0 // pred_check_branch
    %24 = sbr.rel (0) target = $region21
  $region20: #{tpu_custom_call.1} parent=0 // pred_region
    _
  $region21: #{tpu_custom_call.1} parent=0 // pred_fallthru
    _
  // Predicated region
  $region22: #{tpu_custom_call.1} parent=0 // pred_check
    _
  $region23: #{tpu_custom_call.1} parent=0 // pred_check_branch
    %26 = sbr.rel (0) target = $region25
  $region24: #{tpu_custom_call.1} parent=0 // pred_region
    _
  $region25: #{tpu_custom_call.1} parent=0 // pred_fallthru
    _
  // Predicated region
  $region26: #{tpu_custom_call.1} parent=0 // pred_check
    _
  $region27: #{tpu_custom_call.1} parent=0 // pred_check_branch
    %28 = sbr.rel (0) target = $region29
  $region28: #{tpu_custom_call.1} parent=0 // pred_region
    _
  $region29: #{tpu_custom_call.1} parent=0 // pred_fallthru
    _
  // Predicated region
  $region30: #{tpu_custom_call.1} parent=0 // pred_check
    _
  $region31: #{tpu_custom_call.1} parent=0 // pred_check_branch
    %30 = sbr.rel (0) target = $region33
  $region32: #{tpu_custom_call.1} parent=0 // pred_region
    _
  $region33: #{tpu_custom_call.1} parent=0 // pred_fallthru
    _
  %v31 = vld [vmem:[%s0] sm:$0xff]
  %v32 = vld [vmem:[%s1] sm:$0xff]
  %v33 = vld [vmem:[%s1 + $0x8] sm:$0xff]
  %v34 = vld [vmem:[%s1 + $0x10] sm:$0xff]
  %v35 = vld [vmem:[%s1 + $0x18] sm:$0xff]
  %v36 = vld [vmem:[%s2] sm:$0x1]
  %v38 = vlaneseq
  %v39 = vshrl.u32 %v38, 7
  %v40 = vsub.s32 0, %v39
  %v41 = vrot.slane %v36, %v40
  %vm43 = vcmask 261120
  %v45 = vsel %vm43, %v31, 0
  %47 = vmatprep.subr.mxu0 0.0
  %48 = vmatpush1.msra.mxu0 %v32
  %49 = vmatprep.subr.mxu0 0.0
  %50 = vmatpush1.msra.mxu0 %v33
  %51 = vmatprep.subr.mxu0 0.0
  %52 = vmatpush1.msra.mxu0 %v34
  %53 = vmatprep.subr.mxu0 0.0
  %54 = vmatpush1.msra.mxu0 %v35
  %55 = vmatprep.subr.mxu0 0.0
  %56 = vmatpush1.msra.mxu0 0.0
  %57 = vmatprep.subr.mxu0 0.0
  %58 = vmatpush1.msra.mxu0 0.0
  %59 = vmatprep.subr.mxu0 0.0
  %60 = vmatpush1.msra.mxu0 0.0
  %61 = vmatprep.subr.mxu0 0.0
  %62 = vmatpush1.msra.mxu0 0.0
  %63 = vmatprep.subr.mxu0 0.0
  %64 = vmatpush1.msra.mxu0 0.0
  %65 = vmatprep.subr.mxu0 0.0
  %66 = vmatpush1.msra.mxu0 0.0
  %67 = vmatprep.subr.mxu0 0.0
  %68 = vmatpush1.msra.mxu0 0.0
  %69 = vmatprep.subr.mxu0 0.0
  %70 = vmatpush1.msra.mxu0 0.0
  %71 = vmatprep.subr.mxu0 0.0
  %72 = vmatpush1.msra.mxu0 0.0
  %73 = vmatprep.subr.mxu0 0.0
  %74 = vmatpush1.msra.mxu0 0.0
  %75 = vmatprep.subr.mxu0 0.0
  %76 = vmatpush1.msra.mxu0 0.0
  %77 = vmatprep.subr.mxu0 0.0
  %78 = vmatpush1.msra.mxu0 0.0
  %79 = vmatprep.subr.mxu0 0.0
  %80 = vmatpush1.msra.mxu0 0.0
  %81 = vmatprep.subr.mxu0 0.0
  %82 = vmatpush1.msra.mxu0 0.0
  %83 = vmatprep.subr.mxu0 0.0
  %84 = vmatpush1.msra.mxu0 0.0
  %85 = vmatprep.subr.mxu0 0.0
  %86 = vmatpush1.msra.mxu0 0.0
  %87 = vmatprep.subr.mxu0 0.0
  %88 = vmatpush1.msra.mxu0 0.0
  %89 = vmatprep.subr.mxu0 0.0
  %90 = vmatpush1.msra.mxu0 0.0
  %91 = vmatprep.subr.mxu0 0.0
  %92 = vmatpush1.msra.mxu0 0.0
  %93 = vmatprep.subr.mxu0 0.0
  %94 = vmatpush1.msra.mxu0 0.0
  %95 = vmatprep.subr.mxu0 0.0
  %96 = vmatpush1.msra.mxu0 0.0
  %97 = vmatprep.subr.mxu0 0.0
  %98 = vmatpush1.msra.mxu0 0.0
  %99 = vmatprep.subr.mxu0 0.0
  %100 = vmatpush1.msra.mxu0 0.0
  %101 = vmatprep.subr.mxu0 0.0
  %102 = vmatpush1.msra.mxu0 0.0
  %103 = vmatprep.subr.mxu0 0.0
  %104 = vmatpush1.msra.mxu0 0.0
  %105 = vmatprep.subr.mxu0 0.0
  %106 = vmatpush1.msra.mxu0 0.0
  %107 = vmatprep.subr.mxu0 0.0
  %108 = vmatpush1.msra.mxu0 0.0
  %109 = vmatprep.subr.mxu0 0.0
  %110 = vmatpush1.msra.mxu0 0.0
  %111 = vmatprep.mubr.f32.mxu0 0.0
  %112 = vmatmul.mubr.f32.gmra.mrb[0].mxu0 %v45
  %v113 = vpop.f32.mrb[0].mxu0
  %v114 = vadd.f32 %v41, %v113
  %v115 = vpop.f32.mrb[0].mxu0
  %116 = vdwg.mxu0
  %v117 = vmax.f32 %v114, 0.0
  %v118 = vld [vmem:[%s3] sm:$0xff]
  %v119 = vld [vmem:[%s3 + $0x8] sm:$0xff]
  %v120 = vld [vmem:[%s3 + $0x10] sm:$0xff]
  %v121 = vld [vmem:[%s3 + $0x18] sm:$0xff]
  %v122 = vld [vmem:[%s4] sm:$0x1]
  %v124 = vlaneseq
  %v125 = vshrl.u32 %v124, 7
  %v126 = vsub.s32 0, %v125
  %v127 = vrot.slane %v122, %v126
  %v130 = vsel %vm43, %v117, 0
  %132 = vmatprep.subr.mxu0 0.0
  %133 = vmatpush1.msra.mxu0 %v118
  %134 = vmatprep.subr.mxu0 0.0
  %135 = vmatpush1.msra.mxu0 %v119
  %136 = vmatprep.subr.mxu0 0.0
  %137 = vmatpush1.msra.mxu0 %v120
  %138 = vmatprep.subr.mxu0 0.0
  %139 = vmatpush1.msra.mxu0 %v121
  %140 = vmatprep.subr.mxu0 0.0
  %141 = vmatpush1.msra.mxu0 0.0
  %142 = vmatprep.subr.mxu0 0.0
  %143 = vmatpush1.msra.mxu0 0.0
  %144 = vmatprep.subr.mxu0 0.0
  %145 = vmatpush1.msra.mxu0 0.0
  %146 = vmatprep.subr.mxu0 0.0
  %147 = vmatpush1.msra.mxu0 0.0
  %148 = vmatprep.subr.mxu0 0.0
  %149 = vmatpush1.msra.mxu0 0.0
  %150 = vmatprep.subr.mxu0 0.0
  %151 = vmatpush1.msra.mxu0 0.0
  %152 = vmatprep.subr.mxu0 0.0
  %153 = vmatpush1.msra.mxu0 0.0
  %154 = vmatprep.subr.mxu0 0.0
  %155 = vmatpush1.msra.mxu0 0.0
  %156 = vmatprep.subr.mxu0 0.0
  %157 = vmatpush1.msra.mxu0 0.0
  %158 = vmatprep.subr.mxu0 0.0
  %159 = vmatpush1.msra.mxu0 0.0
  %160 = vmatprep.subr.mxu0 0.0
  %161 = vmatpush1.msra.mxu0 0.0
  %162 = vmatprep.subr.mxu0 0.0
  %163 = vmatpush1.msra.mxu0 0.0
  %164 = vmatprep.subr.mxu0 0.0
  %165 = vmatpush1.msra.mxu0 0.0
  %166 = vmatprep.subr.mxu0 0.0
  %167 = vmatpush1.msra.mxu0 0.0
  %168 = vmatprep.subr.mxu0 0.0
  %169 = vmatpush1.msra.mxu0 0.0
  %170 = vmatprep.subr.mxu0 0.0
  %171 = vmatpush1.msra.mxu0 0.0
  %172 = vmatprep.subr.mxu0 0.0
  %173 = vmatpush1.msra.mxu0 0.0
  %174 = vmatprep.subr.mxu0 0.0
  %175 = vmatpush1.msra.mxu0 0.0
  %176 = vmatprep.subr.mxu0 0.0
  %177 = vmatpush1.msra.mxu0 0.0
  %178 = vmatprep.subr.mxu0 0.0
  %179 = vmatpush1.msra.mxu0 0.0
  %180 = vmatprep.subr.mxu0 0.0
  %181 = vmatpush1.msra.mxu0 0.0
  %182 = vmatprep.subr.mxu0 0.0
  %183 = vmatpush1.msra.mxu0 0.0
  %184 = vmatprep.subr.mxu0 0.0
  %185 = vmatpush1.msra.mxu0 0.0
  %186 = vmatprep.subr.mxu0 0.0
  %187 = vmatpush1.msra.mxu0 0.0
  %188 = vmatprep.subr.mxu0 0.0
  %189 = vmatpush1.msra.mxu0 0.0
  %190 = vmatprep.subr.mxu0 0.0
  %191 = vmatpush1.msra.mxu0 0.0
  %192 = vmatprep.subr.mxu0 0.0
  %193 = vmatpush1.msra.mxu0 0.0
  %194 = vmatprep.subr.mxu0 0.0
  %195 = vmatpush1.msra.mxu0 0.0
  %196 = vmatprep.mubr.f32.mxu0 0.0
  %197 = vmatmul.mubr.f32.gmra.mrb[0].mxu0 %v130
  %v198 = vpop.f32.mrb[0].mxu0
  %v199 = vadd.f32 %v127, %v198
  %v200 = vpop.f32.mrb[0].mxu0
  %201 = vdwg.mxu0
  %v202 = vmax.f32 %v199, 0.0
  %v203 = vld [vmem:[%s5] sm:$0xff]
  %v204 = vld [vmem:[%s5 + $0x8] sm:$0xff]
  %v205 = vld [vmem:[#allocation2] sm:$0x1]
  %v207 = vlaneseq
  %v208 = vshrl.u32 %v207, 7
  %v209 = vsub.s32 0, %v208
  %v210 = vrot.slane %v205, %v209
  %vm212 = vcmask 130048
  %v214 = vsel %vm212, %v202, 0
  %216 = vmatprep.subr.mxu0 0.0
  %217 = vmatpush1.msra.mxu0 %v203
  %218 = vmatprep.subr.mxu0 0.0
  %219 = vmatpush1.msra.mxu0 %v204
  %220 = vmatprep.subr.mxu0 0.0
  %221 = vmatpush1.msra.mxu0 0.0
  %222 = vmatprep.subr.mxu0 0.0
  %223 = vmatpush1.msra.mxu0 0.0
  %224 = vmatprep.subr.mxu0 0.0
  %225 = vmatpush1.msra.mxu0 0.0
  %226 = vmatprep.subr.mxu0 0.0
  %227 = vmatpush1.msra.mxu0 0.0
  %228 = vmatprep.subr.mxu0 0.0
  %229 = vmatpush1.msra.mxu0 0.0
  %230 = vmatprep.subr.mxu0 0.0
  %231 = vmatpush1.msra.mxu0 0.0
  %232 = vmatprep.subr.mxu0 0.0
  %233 = vmatpush1.msra.mxu0 0.0
  %234 = vmatprep.subr.mxu0 0.0
  %235 = vmatpush1.msra.mxu0 0.0
  %236 = vmatprep.subr.mxu0 0.0
  %237 = vmatpush1.msra.mxu0 0.0
  %238 = vmatprep.subr.mxu0 0.0
  %239 = vmatpush1.msra.mxu0 0.0
  %240 = vmatprep.subr.mxu0 0.0
  %241 = vmatpush1.msra.mxu0 0.0
  %242 = vmatprep.subr.mxu0 0.0
  %243 = vmatpush1.msra.mxu0 0.0
  %244 = vmatprep.subr.mxu0 0.0
  %245 = vmatpush1.msra.mxu0 0.0
  %246 = vmatprep.subr.mxu0 0.0
  %247 = vmatpush1.msra.mxu0 0.0
  %248 = vmatprep.subr.mxu0 0.0
  %249 = vmatpush1.msra.mxu0 0.0
  %250 = vmatprep.subr.mxu0 0.0
  %251 = vmatpush1.msra.mxu0 0.0
  %252 = vmatprep.subr.mxu0 0.0
  %253 = vmatpush1.msra.mxu0 0.0
  %254 = vmatprep.subr.mxu0 0.0
  %255 = vmatpush1.msra.mxu0 0.0
  %256 = vmatprep.subr.mxu0 0.0
  %257 = vmatpush1.msra.mxu0 0.0
  %258 = vmatprep.subr.mxu0 0.0
  %259 = vmatpush1.msra.mxu0 0.0
  %260 = vmatprep.subr.mxu0 0.0
  %261 = vmatpush1.msra.mxu0 0.0
  %262 = vmatprep.subr.mxu0 0.0
  %263 = vmatpush1.msra.mxu0 0.0
  %264 = vmatprep.subr.mxu0 0.0
  %265 = vmatpush1.msra.mxu0 0.0
  %266 = vmatprep.subr.mxu0 0.0
  %267 = vmatpush1.msra.mxu0 0.0
  %268 = vmatprep.subr.mxu0 0.0
  %269 = vmatpush1.msra.mxu0 0.0
  %270 = vmatprep.subr.mxu0 0.0
  %271 = vmatpush1.msra.mxu0 0.0
  %272 = vmatprep.subr.mxu0 0.0
  %273 = vmatpush1.msra.mxu0 0.0
  %274 = vmatprep.subr.mxu0 0.0
  %275 = vmatpush1.msra.mxu0 0.0
  %276 = vmatprep.subr.mxu0 0.0
  %277 = vmatpush1.msra.mxu0 0.0
  %278 = vmatprep.subr.mxu0 0.0
  %279 = vmatpush1.msra.mxu0 0.0
  %280 = vmatprep.mubr.f32.mxu0 0.0
  %281 = vmatmul.mubr.f32.gmra.mrb[0].mxu0 %v214
  %v282 = vpop.f32.mrb[0].mxu0
  %v283 = vadd.f32 %v210, %v282
  %v284 = vpop.f32.mrb[0].mxu0
  %285 = vdwg.mxu0
  %v286 = vld [vmem:[%s7] sm:$0xff]
  %v287 = vld [vmem:[%s7 + $0x8] sm:$0xff]
  %v288 = vld [vmem:[%s7 + $0x10] sm:$0xff]
  %v289 = vld [vmem:[%s7 + $0x18] sm:$0xff]
  %290 = vmatprep.subr.mxu0 0.0
  %291 = vmatpush1.msra.mxu0 %v286
  %292 = vmatprep.subr.mxu0 0.0
  %293 = vmatpush1.msra.mxu0 %v287
  %294 = vmatprep.subr.mxu0 0.0
  %295 = vmatpush1.msra.mxu0 %v288
  %296 = vmatprep.subr.mxu0 0.0
  %297 = vmatpush1.msra.mxu0 %v289
  %298 = vmatprep.subr.mxu0 0.0
  %299 = vmatpush1.msra.mxu0 0.0
  %300 = vmatprep.subr.mxu0 0.0
  %301 = vmatpush1.msra.mxu0 0.0
  %302 = vmatprep.subr.mxu0 0.0
  %303 = vmatpush1.msra.mxu0 0.0
  %304 = vmatprep.subr.mxu0 0.0
  %305 = vmatpush1.msra.mxu0 0.0
  %306 = vmatprep.subr.mxu0 0.0
  %307 = vmatpush1.msra.mxu0 0.0
  %308 = vmatprep.subr.mxu0 0.0
  %309 = vmatpush1.msra.mxu0 0.0
  %310 = vmatprep.subr.mxu0 0.0
  %311 = vmatpush1.msra.mxu0 0.0
  %312 = vmatprep.subr.mxu0 0.0
  %313 = vmatpush1.msra.mxu0 0.0
  %314 = vmatprep.subr.mxu0 0.0
  %315 = vmatpush1.msra.mxu0 0.0
  %316 = vmatprep.subr.mxu0 0.0
  %317 = vmatpush1.msra.mxu0 0.0
  %318 = vmatprep.subr.mxu0 0.0
  %319 = vmatpush1.msra.mxu0 0.0
  %320 = vmatprep.subr.mxu0 0.0
  %321 = vmatpush1.msra.mxu0 0.0
  %322 = vmatprep.subr.mxu0 0.0
  %323 = vmatpush1.msra.mxu0 0.0
  %324 = vmatprep.subr.mxu0 0.0
  %325 = vmatpush1.msra.mxu0 0.0
  %326 = vmatprep.subr.mxu0 0.0
  %327 = vmatpush1.msra.mxu0 0.0
  %328 = vmatprep.subr.mxu0 0.0
  %329 = vmatpush1.msra.mxu0 0.0
  %330 = vmatprep.subr.mxu0 0.0
  %331 = vmatpush1.msra.mxu0 0.0
  %332 = vmatprep.subr.mxu0 0.0
  %333 = vmatpush1.msra.mxu0 0.0
  %334 = vmatprep.subr.mxu0 0.0
  %335 = vmatpush1.msra.mxu0 0.0
  %336 = vmatprep.subr.mxu0 0.0
  %337 = vmatpush1.msra.mxu0 0.0
  %338 = vmatprep.subr.mxu0 0.0
  %339 = vmatpush1.msra.mxu0 0.0
  %340 = vmatprep.subr.mxu0 0.0
  %341 = vmatpush1.msra.mxu0 0.0
  %342 = vmatprep.subr.mxu0 0.0
  %343 = vmatpush1.msra.mxu0 0.0
  %344 = vmatprep.subr.mxu0 0.0
  %345 = vmatpush1.msra.mxu0 0.0
  %346 = vmatprep.subr.mxu0 0.0
  %347 = vmatpush1.msra.mxu0 0.0
  %348 = vmatprep.subr.mxu0 0.0
  %349 = vmatpush1.msra.mxu0 0.0
  %350 = vmatprep.subr.mxu0 0.0
  %351 = vmatpush1.msra.mxu0 0.0
  %352 = vmatprep.subr.mxu0 0.0
  %353 = vmatpush1.msra.mxu0 0.0
  %354 = vmatprep.mubr.f32.mxu0 0.0
  %355 = vmatmul.mubr.f32.gmra.mrb[0].mxu0 %v45
  %v356 = vpop.f32.mrb[0].mxu0
  %v357 = vadd.f32 0.0, %v356
  %v358 = vpop.f32.mrb[0].mxu0
  %359 = vdwg.mxu0
  %v360 = vadd.f32 %v283, %v357
  %vm361 = vcmask 7168
  %362 = vst.msk [vmem:[%s8] sm:$0xff] %vm361, %v360
  // Predicated region
  $region34: #{tpu_custom_call.1} parent=0 // pred_check
    _
  $region35: #{tpu_custom_call.1} parent=0 // pred_check_branch
    %364 = sbr.rel (0) target = $region37
  $region36: #{tpu_custom_call.1} parent=0 // pred_region
    _
  $region37: #{tpu_custom_call.1} parent=0 // pred_fallthru
    _
  // Predicated region
  $region38: #{tpu_custom_call.1} parent=0 // pred_check
    _
  $region39: #{tpu_custom_call.1} parent=0 // pred_check_branch
    %366 = sbr.rel (0) target = $region41
  $region40: #{tpu_custom_call.1} parent=0 // pred_region
    _
  $region41: #{tpu_custom_call.1} parent=0 // pred_fallthru
    _

</llo_original>
